<compile_context>
chip_gen: v7x
topology: tpu7x:2x2x1
jax: 0.10.0
libtpu: 0.0.40
codegen_flags: <defaults>
</compile_context>

<pallas_src>
import functools

import jax
import jax.numpy as jnp
from jax import lax
from jax.experimental import pallas as pl
from jax.experimental.pallas import tpu as pltpu


def _coors_norm_kernel(scale_ref, x_ref, o_ref, *, eps):
    # x_ref: (D, T) block in VMEM, points lane-dense along T; scale_ref: (1,1) SMEM.
    x = x_ref[...].astype(jnp.float32)                      # (D, T)
    sq = jnp.sum(x * x, axis=0, keepdims=True)              # (1, T) sublane reduce (D small)
    # clamp the *squared* norm at eps^2  <=>  clamp(norm, eps); rsqrt -> EUP slot
    inv = lax.rsqrt(jnp.maximum(sq, eps * eps))             # (1, T)
    inv_scaled = inv * scale_ref[0, 0]                      # fold the learned scale in
    o_ref[...] = (x * inv_scaled).astype(o_ref.dtype)


def _choose_lane_block(n_rows, max_lane_tile):
    """Pick a lane-axis block size satisfying the (8,128) rule with no padding."""
    assert max_lane_tile % 128 == 0
    if n_rows < 128:
        return n_rows                               # block == full array dim (allowed)
    if n_rows <= max_lane_tile:
        return ((n_rows + 127) // 128) * 128        # one (possibly ragged) block
    return max_lane_tile                            # multiple of 128; last block ragged


def coors_norm(coors, scale, *, eps=1e-8, max_lane_tile=65536):
    """coors: (..., D) array. scale: scalar array (1,). Returns same shape/dtype."""
    orig_shape = coors.shape
    d = orig_shape[-1]
    x2d = coors.reshape(-1, d)          # (R, D)
    n_rows = x2d.shape[0]
    xt = x2d.T                          # (D, R): lane-dense layout (layout plumbing)

    lane_block = _choose_lane_block(n_rows, max_lane_tile)
    grid = (pl.cdiv(n_rows, lane_block),)

    scale_smem = jnp.asarray(scale, jnp.float32).reshape(1, 1)

    kernel = functools.partial(_coors_norm_kernel, eps=float(eps))

    out_t = pl.pallas_call(
        kernel,
        out_shape=jax.ShapeDtypeStruct((d, n_rows), coors.dtype),
        grid=grid,
        in_specs=[
            pl.BlockSpec(memory_space=pltpu.MemorySpace.SMEM),     # scale (1,1)
            pl.BlockSpec((d, lane_block), lambda i: (0, i)),       # coords (D, lane_block)
        ],
        out_specs=pl.BlockSpec((d, lane_block), lambda i: (0, i)),
        compiler_params=pltpu.CompilerParams(
            dimension_semantics=("parallel",),
        ),
    )(scale_smem, xt)

    return out_t.T.reshape(orig_shape)


def _reference(coors, scale, eps):
    norm = jnp.linalg.norm(coors.astype(jnp.float32), axis=-1, keepdims=True)
    ref = coors.astype(jnp.float32) / jnp.maximum(norm, eps) * scale[0]
    return ref.astype(coors.dtype)


if __name__ == "__main__":
    # Deterministic parameter init (matches nn.Parameter(torch.zeros(1).fill_(scale_init))).
    scale_init = 1.0
    scale = jnp.full((1,), scale_init, dtype=jnp.float32)
    eps = 1e-8
    key = jax.random.PRNGKey(0)

    # Test 1: small shape consistent with CoorsNorm usage: (batch, n_points, 3).
    k1, k2 = jax.random.split(key)
    coors = jax.random.normal(k1, (2, 8, 3), dtype=jnp.float32)
    out = jax.block_until_ready(coors_norm(coors, scale, eps=eps))
    ref = _reference(coors, scale, eps)
    assert out.shape == coors.shape and out.dtype == coors.dtype
    assert jnp.allclose(out, ref, atol=1e-6, rtol=1e-4)

    # Test 2: exercises multi-step grid + ragged last block (no pad/slice in wrapper).
    coors2 = jax.random.normal(k2, (3, 700, 3), dtype=jnp.float32)   # R = 2100 rows
    out2 = jax.block_until_ready(coors_norm(coors2, scale, eps=eps, max_lane_tile=512))
    ref2 = _reference(coors2, scale, eps)
    assert out2.shape == coors2.shape and out2.dtype == coors2.dtype
    assert jnp.allclose(out2, ref2, atol=1e-6, rtol=1e-4)

    print("KERNEL_OK")
</pallas_src>

<mosaic_0001>
module attributes {stable_mosaic.version = 11 : i64} {
  func.func @_coors_norm_kernel(%arg0: i32, %arg1: memref<1x1xf32, #tpu.memory_space<smem>>, %arg2: memref<3x16xf32, #tpu.memory_space<vmem>>, %arg3: memref<3x16xf32, #tpu.memory_space<vmem>>) attributes {dimension_semantics = [#tpu.dimension_semantics<parallel>], iteration_bounds = array<i64: 1>, scalar_prefetch = 0 : i64, scratch_operands = 0 : i64, tpu.core_type = #tpu.core_type<tc>, window_params = [{transform_indices = @transform_0, window_bounds = array<i64: 1, 1>}, {transform_indices = @transform_1, window_bounds = array<i64: 3, 16>}, {transform_indices = @transform_2, window_bounds = array<i64: 3, 16>}]} {
    %c0 = arith.constant 0 : index
    %c0_0 = arith.constant 0 : index
    %0 = vector.load %arg2[%c0, %c0_0] : memref<3x16xf32, #tpu.memory_space<vmem>>, vector<3x16xf32>
    %1 = arith.mulf %0, %0 : vector<3x16xf32>
    %cst = arith.constant dense<0.000000e+00> : vector<16xf32>
    %2 = vector.multi_reduction <add>, %1, %cst [0] : vector<3x16xf32> to vector<16xf32>
    %3 = vector.shape_cast %2 : vector<16xf32> to vector<1x16xf32>
    %cst_1 = arith.constant 1.000000e-16 : f32
    %4 = vector.broadcast %cst_1 : f32 to vector<1x16xf32>
    %5 = arith.maximumf %3, %4 : vector<1x16xf32>
    %6 = math.rsqrt %5 : vector<1x16xf32>
    %c0_2 = arith.constant 0 : index
    %c0_3 = arith.constant 0 : index
    %7 = memref.load %arg1[%c0_2, %c0_3] : memref<1x1xf32, #tpu.memory_space<smem>>
    %8 = vector.broadcast %7 : f32 to vector<1x16xf32>
    %9 = arith.mulf %6, %8 : vector<1x16xf32>
    %10 = vector.broadcast %9 : vector<1x16xf32> to vector<3x16xf32>
    %11 = arith.mulf %0, %10 : vector<3x16xf32>
    %c0_4 = arith.constant 0 : index
    %c0_5 = arith.constant 0 : index
    %12 = vector.load %arg3[%c0_4, %c0_5] : memref<3x16xf32, #tpu.memory_space<vmem>>, vector<3x16xf32>
    tpu.vector_store %arg3[%c0_4, %c0_5], %11 {strides = array<i32>} : memref<3x16xf32, #tpu.memory_space<vmem>>, vector<3x16xf32>,
    return
  }
  func.func @transform_0(%arg0: i32) -> (i32, i32) {
    %c0_i32 = arith.constant 0 : i32
    %c0_i32_0 = arith.constant 0 : i32
    %c0_i32_1 = arith.constant 0 : i32
    return %c0_i32, %c0_i32_0 : i32, i32
  }
  func.func @transform_1(%arg0: i32) -> (i32, i32) {
    %c0_i32 = arith.constant 0 : i32
    %c0_i32_0 = arith.constant 0 : i32
    return %c0_i32, %arg0 : i32, i32
  }
  func.func @transform_2(%arg0: i32) -> (i32, i32) {
    %c0_i32 = arith.constant 0 : i32
    %c0_i32_0 = arith.constant 0 : i32
    return %c0_i32, %arg0 : i32, i32
  }
}

</mosaic_0001>

<llo_original>
// kernel: tpu_custom_call.1
$region0: #{tpu_custom_call.1}
  #allocation0 [shape = 'u32[]', space=smem, size = 0x4, offset = 0x4, fixed_abs, tag = 'smem constant byte address 0x4 - core index']
  #allocation1 [shape = 'u32[144,128]{1,0:T(1,128)}', space=vmem, size = 0x12000, scoped, tag = 'internal scratch']
  #allocation2 [shape = 'f32[1,1]{1,0:T(1,128)S(6)}', space=smem, size = 0x200, scoped, tag = 'scoped memory for tpu_custom_call.1']
  %s0 = inlined_call_operand.<no memory space> [shape: f32[1,1], index: 0, kind: input, shape index: {}]
  %s1 = inlined_call_operand.hbm [shape: f32[3,16], index: 1, kind: input, shape index: {}]
  %s2 = inlined_call_operand.hbm [shape: f32[3,16], index: 2, kind: output, shape index: {}]
  %s3 = sld [smem:[#allocation0]]
  $region22: #{tpu_custom_call.1} parent=0
    _
  %s5 = ssub.s32 1, %s3
  %s6 = scalar_select 0, %s5, %s3
  %7 = sst [smem:[#allocation2]] %s0
  $region1: #{tpu_custom_call.1} parent=0
    #allocation3 [shape = 'u8[2048]{0}', space=vmem, size = 0x800, scoped, tag = 'input window, operand 1, single buffered']
    #allocation4 [shape = 's32[1]{0}', space=sflag, size = 0x4, scoped, tag = 'scoped memory for tpu_custom_call.1']
    #allocation5 [shape = 's32[1]{0}', space=sflag, size = 0x4, scoped, tag = 'scoped memory for tpu_custom_call.1']
    #allocation6 [shape = 'u8[2048]{0}', space=vmem, size = 0x800, scoped, tag = 'output window, operand 0, single buffered']
    %8 = vsyncpa [#allocation4], 0
    %9 = vsyncpa [#allocation5], 0
    // Predicated region
    $region2: #{tpu_custom_call.1} parent=1 // pred_check
      _
    $region3: #{tpu_custom_call.1} parent=1 // pred_check_branch
      %11 = sbr.rel (0) target = $region5
    $region4: #{tpu_custom_call.1} parent=1 // pred_region
      _
    $region5: #{tpu_custom_call.1} parent=1 // pred_fallthru
      _
    // Predicated region
    $region6: #{tpu_custom_call.1} parent=1 // pred_check
      _
    $region7: #{tpu_custom_call.1} parent=1 // pred_check_branch
      %13 = sbr.rel (0) target = $region9
    $region8: #{tpu_custom_call.1} parent=1 // pred_region
      %s15 = ssub.s32 64, 64
      %16 = vsyncadd [#allocation4], %s15
      %s18 = sshll.u32 [#allocation3], 4
      %s19 = int_to_ptr.vmem [resolvable:$true] %s18
      %21 = dma.hbm_to_vmem [thread:$0]  %s1, 64, %s19, [#allocation4]
    $region9: #{tpu_custom_call.1} parent=1 // pred_fallthru
      _
    // Predicated region
    $region10: #{tpu_custom_call.1} parent=1 // pred_check
      _
    $region11: #{tpu_custom_call.1} parent=1 // pred_check_branch
      %23 = sbr.rel (0) target = $region13
    $region12: #{tpu_custom_call.1} parent=1 // pred_region
      %24 = dma.done [#allocation4], 64
    $region13: #{tpu_custom_call.1} parent=1 // pred_fallthru
      _
    %v25 = vld [vmem:[#allocation3] sm:$0x7]
    %v26 = vmul.f32 %v25, %v25
    %vm27 = vcmask 124928
    %v28 = vsel %vm27, %v26, 0.0
    %v29 = vrot.slane %v28, 4
    %v30 = vadd.f32 %v28, %v29
    %v31 = vrot.slane %v30, 2
    %v32 = vadd.f32 %v30, %v31
    %v33 = vrot.slane %v32, 1
    %v34 = vadd.f32 %v32, %v33
    %v35 = vmax.f32 %v34, 1e-16
    %v36 = vrsqrt.pop %v35
    %s37 = sld [smem:[#allocation2]]
    %v38 = vstv %s37
    %v39 = vmul.f32 %v36, %v38
    %v40 = vmul.f32 %v25, %v39
    %41 = vst.msk [vmem:[#allocation6] sm:$0x7] %vm27, %v40
    // Predicated region
    $region14: #{tpu_custom_call.1} parent=1 // pred_check
      _
    $region15: #{tpu_custom_call.1} parent=1 // pred_check_branch
      %43 = sbr.rel (0) target = $region17
    $region16: #{tpu_custom_call.1} parent=1 // pred_region
      %s45 = ssub.s32 64, 64
      %46 = vsyncadd [#allocation5], %s45
      %s48 = sshll.u32 [#allocation6], 4
      %s49 = int_to_ptr.vmem [resolvable:$true] %s48
      %51 = dma.vmem_to_hbm [thread:$0]  %s49, 64, %s2, [#allocation5]
    $region17: #{tpu_custom_call.1} parent=1 // pred_fallthru
      _
    // Predicated region
    $region18: #{tpu_custom_call.1} parent=1 // pred_check
      _
    $region19: #{tpu_custom_call.1} parent=1 // pred_check_branch
      %53 = sbr.rel (0) target = $region21
    $region20: #{tpu_custom_call.1} parent=1 // pred_region
      %54 = dma.done [#allocation5], 64
    $region21: #{tpu_custom_call.1} parent=1 // pred_fallthru
      _
    %55 = vsyncpa [#allocation4], 1
    %56 = vsyncpa [#allocation5], 1

</llo_original>
